<compile_context>
chip_gen: v7x
topology: tpu7x:2x2x1
jax: 0.10.0
libtpu: 0.0.40
codegen_flags: <defaults>
</compile_context>

<pallas_src>
import functools

import jax
import jax.numpy as jnp
from jax import lax
from jax.experimental import pallas as pl
from jax.experimental.pallas import tpu as pltpu

HID = 64          # hidden width of each MLP (matches the PyTorch module)
OUT_W = 128       # lane-dense output slab width
V_LANE = 127      # lane of the critic value inside the layer-3 output slab


def _mlp_discrete_kernel(s_ref, w_ref, b_ref, raw_ref, logp_ref, *,
                         n_obs_pad, n_acts):
    cd = w_ref.dtype   # compute dtype: f32 everywhere, or bf16 on v6e/v7x

    # static, sublane-aligned slices of the packed weight / bias slabs
    w1 = w_ref[0:n_obs_pad, :]
    w2 = w_ref[n_obs_pad:n_obs_pad + 2 * HID, :]
    w3 = w_ref[n_obs_pad + 2 * HID:n_obs_pad + 4 * HID, :]
    b1 = b_ref[0:1, :]
    b2 = b_ref[1:2, :]
    b3 = b_ref[2:3, :]

    x = s_ref[...].astype(cd)
    h = jnp.tanh(jnp.dot(x, w1, preferred_element_type=jnp.float32) + b1)
    h = jnp.tanh(jnp.dot(h.astype(cd), w2, preferred_element_type=jnp.float32) + b2)
    out3 = jnp.dot(h.astype(cd), w3, preferred_element_type=jnp.float32) + b3

    # lanes [0:n_acts] = actor logits, lane V_LANE = critic value, rest = 0.
    raw_ref[...] = out3

    # numerically-stable log-softmax over the action lanes only
    lane = lax.broadcasted_iota(jnp.int32, out3.shape, 1)
    masked = jnp.where(lane < n_acts, out3, jnp.float32(-1e30))
    m = jnp.max(masked, axis=-1, keepdims=True)
    z = masked - m
    lse = jnp.log(jnp.sum(jnp.exp(z), axis=-1, keepdims=True))
    logp_ref[...] = z - lse


def pack_params(params, n_obs, n_acts, compute_dtype=jnp.float32):
    """Packs the 12 Linear weights/biases into one weight slab + one bias slab.

    Weight slab rows:
      [0              : n_obs          ]  [aw1 | cw1]   (cols 0:64 | 64:128)
      [n_obs_pad      : n_obs_pad + 64 ]  [aw2 |  0 ]
      [n_obs_pad + 64 : n_obs_pad + 128]  [ 0  | cw2]   (block-diagonal layer 2)
      [n_obs_pad + 128: n_obs_pad + 192]  aw3 -> cols [0:n_acts]
      [n_obs_pad + 192: n_obs_pad + 256]  cw3 -> col  V_LANE
    Bias slab rows 0/1/2 hold layer 1/2/3 biases in the same lane layout.

    On v6e/v7x pass compute_dtype=jnp.bfloat16 (2x MXU throughput, f32
    accumulation preserved); keep f32 on v5e (no bf16 VPU/EUP).
    """
    assert n_acts < V_LANE, "action lanes must not overlap the value lane"
    n_obs_pad = max(8, ((n_obs + 7) // 8) * 8)

    w = jnp.zeros((n_obs_pad + 4 * HID, OUT_W), jnp.float32)
    w = w.at[0:n_obs, 0:HID].set(params["aw1"])
    w = w.at[0:n_obs, HID:2 * HID].set(params["cw1"])
    r = n_obs_pad
    w = w.at[r:r + HID, 0:HID].set(params["aw2"])
    w = w.at[r + HID:r + 2 * HID, HID:2 * HID].set(params["cw2"])
    r = n_obs_pad + 2 * HID
    w = w.at[r:r + HID, 0:n_acts].set(params["aw3"])
    w = w.at[r + HID:r + 2 * HID, V_LANE:V_LANE + 1].set(params["cw3"])

    b = jnp.zeros((8, OUT_W), jnp.float32)
    b = b.at[0, 0:HID].set(params["ab1"][0])
    b = b.at[0, HID:2 * HID].set(params["cb1"][0])
    b = b.at[1, 0:HID].set(params["ab2"][0])
    b = b.at[1, HID:2 * HID].set(params["cb2"][0])
    b = b.at[2, 0:n_acts].set(params["ab3"][0])
    b = b.at[2, V_LANE].set(params["cb3"][0, 0])
    return w.astype(compute_dtype), b


def _choose_tile(batch):
    """Batch tile: multiple of 8, capped at 512, >=2 grid steps when possible."""
    b8 = max(8, ((batch + 7) // 8) * 8)
    if b8 >= 1024:
        return 512                          # amortizes ~0.35us/step overhead
    if b8 >= 16:
        return ((b8 // 2 + 7) // 8) * 8     # at least 2 steps (v7x megacore)
    return b8


def mlp_discrete_pallas(s, w_packed, b_packed, n_acts, *, tb=None):
    """Fused actor/critic forward.

    Returns (logits, log_softmax(logits), values) with shapes
    (B, n_acts), (B, n_acts), (B, 1).
    """
    batch, n_obs = s.shape
    n_obs_pad = w_packed.shape[0] - 4 * HID
    assert n_obs <= n_obs_pad

    if tb is None:
        tb = _choose_tile(batch)
    b_pad = pl.cdiv(batch, tb) * tb

    # zero-pad batch rows / observation columns (zeros contribute 0 to the dot)
    s_p = jnp.zeros((b_pad, n_obs_pad), s.dtype).at[:batch, :n_obs].set(s)

    kernel = functools.partial(_mlp_discrete_kernel,
                               n_obs_pad=n_obs_pad, n_acts=n_acts)

    raw, logp = pl.pallas_call(
        kernel,
        out_shape=[
            jax.ShapeDtypeStruct((b_pad, OUT_W), jnp.float32),
            jax.ShapeDtypeStruct((b_pad, OUT_W), jnp.float32),
        ],
        grid_spec=pltpu.PrefetchScalarGridSpec(
            num_scalar_prefetch=0,
            grid=(b_pad // tb,),
            in_specs=[
                pl.BlockSpec((tb, n_obs_pad), lambda i: (i, 0)),
                pl.BlockSpec(w_packed.shape, lambda i: (0, 0)),   # resident
                pl.BlockSpec(b_packed.shape, lambda i: (0, 0)),   # resident
            ],
            out_specs=[
                pl.BlockSpec((tb, OUT_W), lambda i: (i, 0)),
                pl.BlockSpec((tb, OUT_W), lambda i: (i, 0)),
            ],
        ),
        compiler_params=pltpu.CompilerParams(
            dimension_semantics=("parallel",),
        ),
    )(s_p, w_packed, b_packed)

    logits = raw[:batch, :n_acts]
    values = raw[:batch, V_LANE:V_LANE + 1]
    logp_all = logp[:batch, :n_acts]
    return logits, logp_all, values


def init_params(key, n_obs, n_acts):
    """PyTorch-style Linear init: U(-1/sqrt(fan_in), 1/sqrt(fan_in))."""
    def linear(k, fan_in, fan_out):
        kw, kb = jax.random.split(k)
        bound = 1.0 / jnp.sqrt(float(fan_in))
        w = jax.random.uniform(kw, (fan_in, fan_out), jnp.float32, -bound, bound)
        b = jax.random.uniform(kb, (1, fan_out), jnp.float32, -bound, bound)
        return w, b

    keys = jax.random.split(key, 6)
    aw1, ab1 = linear(keys[0], n_obs, HID)
    aw2, ab2 = linear(keys[1], HID, HID)
    aw3, ab3 = linear(keys[2], HID, n_acts)
    cw1, cb1 = linear(keys[3], n_obs, HID)
    cw2, cb2 = linear(keys[4], HID, HID)
    cw3, cb3 = linear(keys[5], HID, 1)
    return dict(
        aw1=aw1, ab1=ab1, aw2=aw2, ab2=ab2, aw3=aw3, ab3=ab3,
        cw1=cw1, cb1=cb1, cw2=cw2, cb2=cb2, cw3=cw3, cb3=cb3,
    )


@functools.partial(jax.jit, static_argnames=("n_acts",))
def mlp_discrete_forward(s, w_packed, b_packed, sample_key, n_acts):
    """Equivalent of MLPDiscrete.forward: returns (a, log_p, v)."""
    logits, logp_all, v = mlp_discrete_pallas(s, w_packed, b_packed, n_acts)
    # Categorical sampling + gather stay in JAX glue (not hot-path math).
    a = jax.random.categorical(sample_key, logits, axis=-1)
    log_p = jnp.take_along_axis(logp_all, a[:, None], axis=-1)[:, 0]
    return a, log_p, v


if __name__ == "__main__":
    B, N_OBS, N_ACTS = 8, 32, 6

    key = jax.random.PRNGKey(0)
    k_params, k_obs, k_sample = jax.random.split(key, 3)

    params = init_params(k_params, N_OBS, N_ACTS)
    # On v6e/v7x, compute_dtype=jnp.bfloat16 doubles MXU throughput (f32
    # accumulation kept); leave f32 here so the tight tolerance check holds.
    w_packed, b_packed = pack_params(params, N_OBS, N_ACTS,
                                     compute_dtype=jnp.float32)
    s = jax.random.normal(k_obs, (B, N_OBS), jnp.float32)

    a, log_p, v = mlp_discrete_forward(s, w_packed, b_packed, k_sample, N_ACTS)
    jax.block_until_ready((a, log_p, v))

    # quick sanity check against a pure-JAX reference of the two MLPs
    def ref_mlp(x, w1, b1, w2, b2, w3, b3):
        h = jnp.tanh(x @ w1 + b1)
        h = jnp.tanh(h @ w2 + b2)
        return h @ w3 + b3

    logits_ref = ref_mlp(s, params["aw1"], params["ab1"], params["aw2"],
                         params["ab2"], params["aw3"], params["ab3"])
    v_ref = ref_mlp(s, params["cw1"], params["cb1"], params["cw2"],
                    params["cb2"], params["cw3"], params["cb3"])

    logits_k, logp_k, v_k = mlp_discrete_pallas(s, w_packed, b_packed, N_ACTS)
    assert jnp.allclose(logits_k, logits_ref, atol=1e-4)
    assert jnp.allclose(v_k, v_ref, atol=1e-4)
    assert jnp.allclose(logp_k, jax.nn.log_softmax(logits_ref, axis=-1), atol=1e-4)
    assert a.shape == (B,) and log_p.shape == (B,) and v.shape == (B, 1)

    print("KERNEL_OK")
</pallas_src>

<mosaic_0001>
module attributes {stable_mosaic.version = 11 : i64} {
  func.func @_mlp_discrete_kernel(%arg0: i32, %arg1: memref<8x32xf32, #tpu.memory_space<vmem>>, %arg2: memref<288x128xf32, #tpu.memory_space<vmem>>, %arg3: memref<8x128xf32, #tpu.memory_space<vmem>>, %arg4: memref<8x128xf32, #tpu.memory_space<vmem>>, %arg5: memref<8x128xf32, #tpu.memory_space<vmem>>) attributes {dimension_semantics = [#tpu.dimension_semantics<parallel>], iteration_bounds = array<i64: 1>, scalar_prefetch = 0 : i64, scratch_operands = 0 : i64, tpu.core_type = #tpu.core_type<tc>, window_params = [{transform_indices = @transform_0, window_bounds = array<i64: 8, 32>}, {pipeline_mode = #tpu.pipeline_mode<synchronous>, transform_indices = @transform_1, window_bounds = array<i64: 288, 128>}, {pipeline_mode = #tpu.pipeline_mode<synchronous>, transform_indices = @transform_2, window_bounds = array<i64: 8, 128>}, {transform_indices = @transform_3, window_bounds = array<i64: 8, 128>}, {transform_indices = @transform_4, window_bounds = array<i64: 8, 128>}]} {
    %c0 = arith.constant 0 : index
    %c0_0 = arith.constant 0 : index
    %0 = vector.load %arg2[%c0, %c0_0] : memref<288x128xf32, #tpu.memory_space<vmem>>, vector<32x128xf32>
    %c32 = arith.constant 32 : index
    %c0_1 = arith.constant 0 : index
    %1 = vector.load %arg2[%c32, %c0_1] : memref<288x128xf32, #tpu.memory_space<vmem>>, vector<128x128xf32>
    %c160 = arith.constant 160 : index
    %c0_2 = arith.constant 0 : index
    %2 = vector.load %arg2[%c160, %c0_2] : memref<288x128xf32, #tpu.memory_space<vmem>>, vector<128x128xf32>
    %c0_3 = arith.constant 0 : index
    %c0_4 = arith.constant 0 : index
    %3 = vector.load %arg3[%c0_3, %c0_4] : memref<8x128xf32, #tpu.memory_space<vmem>>, vector<1x128xf32>
    %c1 = arith.constant 1 : index
    %c0_5 = arith.constant 0 : index
    %4 = vector.load %arg3[%c1, %c0_5] : memref<8x128xf32, #tpu.memory_space<vmem>>, vector<1x128xf32>
    %c2 = arith.constant 2 : index
    %c0_6 = arith.constant 0 : index
    %5 = vector.load %arg3[%c2, %c0_6] : memref<8x128xf32, #tpu.memory_space<vmem>>, vector<1x128xf32>
    %c0_7 = arith.constant 0 : index
    %c0_8 = arith.constant 0 : index
    %6 = vector.load %arg1[%c0_7, %c0_8] : memref<8x32xf32, #tpu.memory_space<vmem>>, vector<8x32xf32>
    %cst = arith.constant dense<0.000000e+00> : vector<8x128xf32>
    %7 = tpu.matmul %6, %0, %cst {dimension_numbers = #tpu.dot_dimension_numbers<[1], [0], [0], [1], [0, 0, 1, 1], [], []>} : vector<8x32xf32>, vector<32x128xf32>, vector<8x128xf32> -> vector<8x128xf32>
    %8 = vector.broadcast %3 : vector<1x128xf32> to vector<8x128xf32>
    %9 = arith.addf %7, %8 : vector<8x128xf32>
    %10 = math.tanh %9 : vector<8x128xf32>
    %cst_9 = arith.constant dense<0.000000e+00> : vector<8x128xf32>
    %11 = tpu.matmul %10, %1, %cst_9 {dimension_numbers = #tpu.dot_dimension_numbers<[1], [0], [0], [1], [0, 0, 1, 1], [], []>} : vector<8x128xf32>, vector<128x128xf32>, vector<8x128xf32> -> vector<8x128xf32>
    %12 = vector.broadcast %4 : vector<1x128xf32> to vector<8x128xf32>
    %13 = arith.addf %11, %12 : vector<8x128xf32>
    %14 = math.tanh %13 : vector<8x128xf32>
    %cst_10 = arith.constant dense<0.000000e+00> : vector<8x128xf32>
    %15 = tpu.matmul %14, %2, %cst_10 {dimension_numbers = #tpu.dot_dimension_numbers<[1], [0], [0], [1], [0, 0, 1, 1], [], []>} : vector<8x128xf32>, vector<128x128xf32>, vector<8x128xf32> -> vector<8x128xf32>
    %16 = vector.broadcast %5 : vector<1x128xf32> to vector<8x128xf32>
    %17 = arith.addf %15, %16 : vector<8x128xf32>
    %c0_11 = arith.constant 0 : index
    %c0_12 = arith.constant 0 : index
    %18 = vector.load %arg4[%c0_11, %c0_12] : memref<8x128xf32, #tpu.memory_space<vmem>>, vector<8x128xf32>
    tpu.vector_store %arg4[%c0_11, %c0_12], %17 {strides = array<i32>} : memref<8x128xf32, #tpu.memory_space<vmem>>, vector<8x128xf32>,
    %19 = tpu.iota {dimensions = array<i32: 1>} : vector<8x128xi32>
    %c6_i32 = arith.constant 6 : i32
    %20 = vector.broadcast %c6_i32 : i32 to vector<8x128xi32>
    %21 = arith.cmpi slt, %19, %20 : vector<8x128xi32>
    %cst_13 = arith.constant -1.000000e+30 : f32
    %22 = vector.broadcast %cst_13 : f32 to vector<8x128xf32>
    %23 = arith.select %21, %17, %22 : vector<8x128xi1>, vector<8x128xf32>
    %cst_14 = arith.constant dense<0xFF800000> : vector<8xf32>
    %24 = vector.multi_reduction <maximumf>, %23, %cst_14 [1] : vector<8x128xf32> to vector<8xf32>
    %25 = vector.shape_cast %24 : vector<8xf32> to vector<8x1xf32>
    %26 = vector.broadcast %25 : vector<8x1xf32> to vector<8x128xf32>
    %27 = arith.subf %23, %26 : vector<8x128xf32>
    %28 = math.exp %27 : vector<8x128xf32>
    %cst_15 = arith.constant dense<0.000000e+00> : vector<8xf32>
    %29 = vector.multi_reduction <add>, %28, %cst_15 [1] : vector<8x128xf32> to vector<8xf32>
    %30 = vector.shape_cast %29 : vector<8xf32> to vector<8x1xf32>
    %31 = math.log %30 : vector<8x1xf32>
    %32 = vector.broadcast %31 : vector<8x1xf32> to vector<8x128xf32>
    %33 = arith.subf %27, %32 : vector<8x128xf32>
    %c0_16 = arith.constant 0 : index
    %c0_17 = arith.constant 0 : index
    %34 = vector.load %arg5[%c0_16, %c0_17] : memref<8x128xf32, #tpu.memory_space<vmem>>, vector<8x128xf32>
    tpu.vector_store %arg5[%c0_16, %c0_17], %33 {strides = array<i32>} : memref<8x128xf32, #tpu.memory_space<vmem>>, vector<8x128xf32>,
    return
  }
  func.func @transform_0(%arg0: i32) -> (i32, i32) {
    %c0_i32 = arith.constant 0 : i32
    %c0_i32_0 = arith.constant 0 : i32
    return %arg0, %c0_i32 : i32, i32
  }
  func.func @transform_1(%arg0: i32) -> (i32, i32) {
    %c0_i32 = arith.constant 0 : i32
    %c0_i32_0 = arith.constant 0 : i32
    %c0_i32_1 = arith.constant 0 : i32
    return %c0_i32, %c0_i32_0 : i32, i32
  }
  func.func @transform_2(%arg0: i32) -> (i32, i32) {
    %c0_i32 = arith.constant 0 : i32
    %c0_i32_0 = arith.constant 0 : i32
    %c0_i32_1 = arith.constant 0 : i32
    return %c0_i32, %c0_i32_0 : i32, i32
  }
  func.func @transform_3(%arg0: i32) -> (i32, i32) {
    %c0_i32 = arith.constant 0 : i32
    %c0_i32_0 = arith.constant 0 : i32
    return %arg0, %c0_i32 : i32, i32
  }
  func.func @transform_4(%arg0: i32) -> (i32, i32) {
    %c0_i32 = arith.constant 0 : i32
    %c0_i32_0 = arith.constant 0 : i32
    return %arg0, %c0_i32 : i32, i32
  }
}

</mosaic_0001>

<llo_original>
// kernel: mlp_discrete_forward.1
$region0: #{mlp_discrete_forward.1}
  #allocation0 [shape = 'u32[]', space=smem, size = 0x4, offset = 0x4, fixed_abs, tag = 'smem constant byte address 0x4 - core index']
  #allocation1 [shape = 'u32[144,128]{1,0:T(1,128)}', space=vmem, size = 0x12000, scoped, tag = 'internal scratch']
  %s0 = inlined_call_operand.vmem [shape: f32[8,32], index: 0, kind: input, shape index: {}]
  %s1 = inlined_call_operand.hbm [shape: f32[288,128], index: 1, kind: input, shape index: {}]
  %s2 = inlined_call_operand.vmem [shape: f32[8,128], index: 2, kind: input, shape index: {}]
  %s3 = inlined_call_operand.vmem [shape: f32[8,128], index: 3, kind: output, shape index: {0}]
  %s4 = inlined_call_operand.vmem [shape: f32[8,128], index: 4, kind: output, shape index: {1}]
  %5 = xla_tuple %s3, %s4
  %s6 = sld [smem:[#allocation0]]
  $region34: #{mlp_discrete_forward.1} parent=0
    _
  %s8 = ssub.s32 1, %s6
  %s9 = scalar_select 0, %s8, %s6
  $region1: #{mlp_discrete_forward.1} parent=0
    #allocation2 [shape = 'u8[147456]{0}', space=vmem, size = 0x24000, scoped, tag = 'input window, operand 1, single buffered']
    #allocation3 [shape = 's32[1]{0}', space=sflag, size = 0x4, scoped, tag = 'scoped memory for mlp_discrete_forward.1']
    %10 = vsyncpa [#allocation3], 0
    // Predicated region
    $region2: #{mlp_discrete_forward.1} parent=1 // pred_check
      _
    $region3: #{mlp_discrete_forward.1} parent=1 // pred_check_branch
      %12 = sbr.rel (0) target = $region5
    $region4: #{mlp_discrete_forward.1} parent=1 // pred_region
      _
    $region5: #{mlp_discrete_forward.1} parent=1 // pred_fallthru
      _
    // Predicated region
    $region6: #{mlp_discrete_forward.1} parent=1 // pred_check
      _
    $region7: #{mlp_discrete_forward.1} parent=1 // pred_check_branch
      %14 = sbr.rel (0) target = $region9
    $region8: #{mlp_discrete_forward.1} parent=1 // pred_region
      %s16 = ssub.s32 4608, 4608
      %17 = vsyncadd [#allocation3], %s16
      %s18 = sshll.u32 [#allocation2], 4
      %s19 = int_to_ptr.vmem [resolvable:$true] %s18
      %24 = dma.hbm_to_vmem [thread:$0]  %s1, 4608, %s19, [#allocation3], 128, 128, 8
    $region9: #{mlp_discrete_forward.1} parent=1 // pred_fallthru
      _
    // Predicated region
    $region10: #{mlp_discrete_forward.1} parent=1 // pred_check
      _
    $region11: #{mlp_discrete_forward.1} parent=1 // pred_check_branch
      %26 = sbr.rel (0) target = $region13
    $region12: #{mlp_discrete_forward.1} parent=1 // pred_region
      _
    $region13: #{mlp_discrete_forward.1} parent=1 // pred_fallthru
      _
    // Predicated region
    $region14: #{mlp_discrete_forward.1} parent=1 // pred_check
      _
    $region15: #{mlp_discrete_forward.1} parent=1 // pred_check_branch
      %28 = sbr.rel (0) target = $region17
    $region16: #{mlp_discrete_forward.1} parent=1 // pred_region
      %29 = dma.done [#allocation3], 4608
    $region17: #{mlp_discrete_forward.1} parent=1 // pred_fallthru
      _
    %v30 = vld [vmem:[#allocation2] sm:$0xff]
    %v31 = vld [vmem:[#allocation2 + $0x8] sm:$0xff]
    %v32 = vld [vmem:[#allocation2 + $0x10] sm:$0xff]
    %v33 = vld [vmem:[#allocation2 + $0x18] sm:$0xff]
    %v34 = vld [vmem:[#allocation2 + $0x20] sm:$0xff]
    %v35 = vld [vmem:[#allocation2 + $0x28] sm:$0xff]
    %v36 = vld [vmem:[#allocation2 + $0x30] sm:$0xff]
    %v37 = vld [vmem:[#allocation2 + $0x38] sm:$0xff]
    %v38 = vld [vmem:[#allocation2 + $0x40] sm:$0xff]
    %v39 = vld [vmem:[#allocation2 + $0x48] sm:$0xff]
    %v40 = vld [vmem:[#allocation2 + $0x50] sm:$0xff]
    %v41 = vld [vmem:[#allocation2 + $0x58] sm:$0xff]
    %v42 = vld [vmem:[#allocation2 + $0x60] sm:$0xff]
    %v43 = vld [vmem:[#allocation2 + $0x68] sm:$0xff]
    %v44 = vld [vmem:[#allocation2 + $0x70] sm:$0xff]
    %v45 = vld [vmem:[#allocation2 + $0x78] sm:$0xff]
    %v46 = vld [vmem:[#allocation2 + $0x80] sm:$0xff]
    %v47 = vld [vmem:[#allocation2 + $0x88] sm:$0xff]
    %v48 = vld [vmem:[#allocation2 + $0x90] sm:$0xff]
    %v49 = vld [vmem:[#allocation2 + $0x98] sm:$0xff]
    %v50 = vld [vmem:[#allocation2 + $0xa0] sm:$0xff]
    %v51 = vld [vmem:[#allocation2 + $0xa8] sm:$0xff]
    %v52 = vld [vmem:[#allocation2 + $0xb0] sm:$0xff]
    %v53 = vld [vmem:[#allocation2 + $0xb8] sm:$0xff]
    %v54 = vld [vmem:[#allocation2 + $0xc0] sm:$0xff]
    %v55 = vld [vmem:[#allocation2 + $0xc8] sm:$0xff]
    %v56 = vld [vmem:[#allocation2 + $0xd0] sm:$0xff]
    %v57 = vld [vmem:[#allocation2 + $0xd8] sm:$0xff]
    %v58 = vld [vmem:[#allocation2 + $0xe0] sm:$0xff]
    %v59 = vld [vmem:[#allocation2 + $0xe8] sm:$0xff]
    %v60 = vld [vmem:[#allocation2 + $0xf0] sm:$0xff]
    %v61 = vld [vmem:[#allocation2 + $0xf8] sm:$0xff]
    %v62 = vld [vmem:[#allocation2 + $0x100] sm:$0xff]
    %v63 = vld [vmem:[#allocation2 + $0x108] sm:$0xff]
    %v64 = vld [vmem:[#allocation2 + $0x110] sm:$0xff]
    %v65 = vld [vmem:[#allocation2 + $0x118] sm:$0xff]
    %v66 = vld [vmem:[%s2] sm:$0x1]
    %v67 = vld [vmem:[%s2 + $0x1] sm:$0x1]
    %v68 = vld [vmem:[%s2 + $0x2] sm:$0x1]
    %v69 = vld [vmem:[%s0] sm:$0xff]
    %v70 = vlaneseq
    %v71 = vshrl.u32 %v70, 7
    %v72 = vsub.s32 0, %v71
    %v73 = vrot.slane %v66, %v72
    %vm74 = vcmask 261120
    %v76 = vsel %vm74, %v69, 0
    %78 = vmatprep.subr.mxu0 0.0
    %79 = vmatpush1.msra.mxu0 %v30
    %80 = vmatprep.subr.mxu0 0.0
    %81 = vmatpush1.msra.mxu0 %v31
    %82 = vmatprep.subr.mxu0 0.0
    %83 = vmatpush1.msra.mxu0 %v32
    %84 = vmatprep.subr.mxu0 0.0
    %85 = vmatpush1.msra.mxu0 %v33
    %86 = vmatprep.subr.mxu0 0.0
    %87 = vmatpush1.msra.mxu0 0.0
    %88 = vmatprep.subr.mxu0 0.0
    %89 = vmatpush1.msra.mxu0 0.0
    %90 = vmatprep.subr.mxu0 0.0
    %91 = vmatpush1.msra.mxu0 0.0
    %92 = vmatprep.subr.mxu0 0.0
    %93 = vmatpush1.msra.mxu0 0.0
    %94 = vmatprep.subr.mxu0 0.0
    %95 = vmatpush1.msra.mxu0 0.0
    %96 = vmatprep.subr.mxu0 0.0
    %97 = vmatpush1.msra.mxu0 0.0
    %98 = vmatprep.subr.mxu0 0.0
    %99 = vmatpush1.msra.mxu0 0.0
    %100 = vmatprep.subr.mxu0 0.0
    %101 = vmatpush1.msra.mxu0 0.0
    %102 = vmatprep.subr.mxu0 0.0
    %103 = vmatpush1.msra.mxu0 0.0
    %104 = vmatprep.subr.mxu0 0.0
    %105 = vmatpush1.msra.mxu0 0.0
    %106 = vmatprep.subr.mxu0 0.0
    %107 = vmatpush1.msra.mxu0 0.0
    %108 = vmatprep.subr.mxu0 0.0
    %109 = vmatpush1.msra.mxu0 0.0
    %110 = vmatprep.subr.mxu0 0.0
    %111 = vmatpush1.msra.mxu0 0.0
    %112 = vmatprep.subr.mxu0 0.0
    %113 = vmatpush1.msra.mxu0 0.0
    %114 = vmatprep.subr.mxu0 0.0
    %115 = vmatpush1.msra.mxu0 0.0
    %116 = vmatprep.subr.mxu0 0.0
    %117 = vmatpush1.msra.mxu0 0.0
    %118 = vmatprep.subr.mxu0 0.0
    %119 = vmatpush1.msra.mxu0 0.0
    %120 = vmatprep.subr.mxu0 0.0
    %121 = vmatpush1.msra.mxu0 0.0
    %122 = vmatprep.subr.mxu0 0.0
    %123 = vmatpush1.msra.mxu0 0.0
    %124 = vmatprep.subr.mxu0 0.0
    %125 = vmatpush1.msra.mxu0 0.0
    %126 = vmatprep.subr.mxu0 0.0
    %127 = vmatpush1.msra.mxu0 0.0
    %128 = vmatprep.subr.mxu0 0.0
    %129 = vmatpush1.msra.mxu0 0.0
    %130 = vmatprep.subr.mxu0 0.0
    %131 = vmatpush1.msra.mxu0 0.0
    %132 = vmatprep.subr.mxu0 0.0
    %133 = vmatpush1.msra.mxu0 0.0
    %134 = vmatprep.subr.mxu0 0.0
    %135 = vmatpush1.msra.mxu0 0.0
    %136 = vmatprep.subr.mxu0 0.0
    %137 = vmatpush1.msra.mxu0 0.0
    %138 = vmatprep.subr.mxu0 0.0
    %139 = vmatpush1.msra.mxu0 0.0
    %140 = vmatprep.subr.mxu0 0.0
    %141 = vmatpush1.msra.mxu0 0.0
    %142 = vmatprep.mubr.f32.mxu0 0.0
    %143 = vmatmul.mubr.f32.gmra.mrb[0].mxu0 %v76
    %v144 = vpop.f32.mrb[0].mxu0
    %v145 = vadd.f32 %v73, %v144
    %v146 = vpop.f32.mrb[0].mxu0
    %147 = vdwg.mxu0
    %v148 = vtanh.pop %v145
    %v149 = vlaneseq
    %v150 = vshrl.u32 %v149, 7
    %v151 = vsub.s32 0, %v150
    %v152 = vrot.slane %v67, %v151
    %153 = vmatprep.subr.mxu0 0.0
    %154 = vmatpush1.msra.mxu0 %v34
    %155 = vmatprep.subr.mxu0 0.0
    %156 = vmatpush1.msra.mxu0 %v35
    %157 = vmatprep.subr.mxu0 0.0
    %158 = vmatpush1.msra.mxu0 %v36
    %159 = vmatprep.subr.mxu0 0.0
    %160 = vmatpush1.msra.mxu0 %v37
    %161 = vmatprep.subr.mxu0 0.0
    %162 = vmatpush1.msra.mxu0 %v38
    %163 = vmatprep.subr.mxu0 0.0
    %164 = vmatpush1.msra.mxu0 %v39
    %165 = vmatprep.subr.mxu0 0.0
    %166 = vmatpush1.msra.mxu0 %v40
    %167 = vmatprep.subr.mxu0 0.0
    %168 = vmatpush1.msra.mxu0 %v41
    %169 = vmatprep.subr.mxu0 0.0
    %170 = vmatpush1.msra.mxu0 %v42
    %171 = vmatprep.subr.mxu0 0.0
    %172 = vmatpush1.msra.mxu0 %v43
    %173 = vmatprep.subr.mxu0 0.0
    %174 = vmatpush1.msra.mxu0 %v44
    %175 = vmatprep.subr.mxu0 0.0
    %176 = vmatpush1.msra.mxu0 %v45
    %177 = vmatprep.subr.mxu0 0.0
    %178 = vmatpush1.msra.mxu0 %v46
    %179 = vmatprep.subr.mxu0 0.0
    %180 = vmatpush1.msra.mxu0 %v47
    %181 = vmatprep.subr.mxu0 0.0
    %182 = vmatpush1.msra.mxu0 %v48
    %183 = vmatprep.subr.mxu0 0.0
    %184 = vmatpush1.msra.mxu0 %v49
    %185 = vmatprep.subr.mxu0 0.0
    %186 = vmatpush1.msra.mxu0 0.0
    %187 = vmatprep.subr.mxu0 0.0
    %188 = vmatpush1.msra.mxu0 0.0
    %189 = vmatprep.subr.mxu0 0.0
    %190 = vmatpush1.msra.mxu0 0.0
    %191 = vmatprep.subr.mxu0 0.0
    %192 = vmatpush1.msra.mxu0 0.0
    %193 = vmatprep.subr.mxu0 0.0
    %194 = vmatpush1.msra.mxu0 0.0
    %195 = vmatprep.subr.mxu0 0.0
    %196 = vmatpush1.msra.mxu0 0.0
    %197 = vmatprep.subr.mxu0 0.0
    %198 = vmatpush1.msra.mxu0 0.0
    %199 = vmatprep.subr.mxu0 0.0
    %200 = vmatpush1.msra.mxu0 0.0
    %201 = vmatprep.subr.mxu0 0.0
    %202 = vmatpush1.msra.mxu0 0.0
    %203 = vmatprep.subr.mxu0 0.0
    %204 = vmatpush1.msra.mxu0 0.0
    %205 = vmatprep.subr.mxu0 0.0
    %206 = vmatpush1.msra.mxu0 0.0
    %207 = vmatprep.subr.mxu0 0.0
    %208 = vmatpush1.msra.mxu0 0.0
    %209 = vmatprep.subr.mxu0 0.0
    %210 = vmatpush1.msra.mxu0 0.0
    %211 = vmatprep.subr.mxu0 0.0
    %212 = vmatpush1.msra.mxu0 0.0
    %213 = vmatprep.subr.mxu0 0.0
    %214 = vmatpush1.msra.mxu0 0.0
    %215 = vmatprep.subr.mxu0 0.0
    %216 = vmatpush1.msra.mxu0 0.0
    %217 = vmatprep.mubr.f32.mxu0 0.0
    %218 = vmatmul.mubr.f32.gmra.mrb[0].mxu0 %v148
    %v219 = vpop.f32.mrb[0].mxu0
    %v220 = vadd.f32 %v152, %v219
    %v221 = vpop.f32.mrb[0].mxu0
    %222 = vdwg.mxu0
    %v223 = vtanh.pop %v220
    %v224 = vlaneseq
    %v225 = vshrl.u32 %v224, 7
    %v226 = vsub.s32 0, %v225
    %v227 = vrot.slane %v68, %v226
    %228 = vmatprep.subr.mxu0 0.0
    %229 = vmatpush1.msra.mxu0 %v50
    %230 = vmatprep.subr.mxu0 0.0
    %231 = vmatpush1.msra.mxu0 %v51
    %232 = vmatprep.subr.mxu0 0.0
    %233 = vmatpush1.msra.mxu0 %v52
    %234 = vmatprep.subr.mxu0 0.0
    %235 = vmatpush1.msra.mxu0 %v53
    %236 = vmatprep.subr.mxu0 0.0
    %237 = vmatpush1.msra.mxu0 %v54
    %238 = vmatprep.subr.mxu0 0.0
    %239 = vmatpush1.msra.mxu0 %v55
    %240 = vmatprep.subr.mxu0 0.0
    %241 = vmatpush1.msra.mxu0 %v56
    %242 = vmatprep.subr.mxu0 0.0
    %243 = vmatpush1.msra.mxu0 %v57
    %244 = vmatprep.subr.mxu0 0.0
    %245 = vmatpush1.msra.mxu0 %v58
    %246 = vmatprep.subr.mxu0 0.0
    %247 = vmatpush1.msra.mxu0 %v59
    %248 = vmatprep.subr.mxu0 0.0
    %249 = vmatpush1.msra.mxu0 %v60
    %250 = vmatprep.subr.mxu0 0.0
    %251 = vmatpush1.msra.mxu0 %v61
    %252 = vmatprep.subr.mxu0 0.0
    %253 = vmatpush1.msra.mxu0 %v62
    %254 = vmatprep.subr.mxu0 0.0
    %255 = vmatpush1.msra.mxu0 %v63
    %256 = vmatprep.subr.mxu0 0.0
    %257 = vmatpush1.msra.mxu0 %v64
    %258 = vmatprep.subr.mxu0 0.0
    %259 = vmatpush1.msra.mxu0 %v65
    %260 = vmatprep.subr.mxu0 0.0
    %261 = vmatpush1.msra.mxu0 0.0
    %262 = vmatprep.subr.mxu0 0.0
    %263 = vmatpush1.msra.mxu0 0.0
    %264 = vmatprep.subr.mxu0 0.0
    %265 = vmatpush1.msra.mxu0 0.0
    %266 = vmatprep.subr.mxu0 0.0
    %267 = vmatpush1.msra.mxu0 0.0
    %268 = vmatprep.subr.mxu0 0.0
    %269 = vmatpush1.msra.mxu0 0.0
    %270 = vmatprep.subr.mxu0 0.0
    %271 = vmatpush1.msra.mxu0 0.0
    %272 = vmatprep.subr.mxu0 0.0
    %273 = vmatpush1.msra.mxu0 0.0
    %274 = vmatprep.subr.mxu0 0.0
    %275 = vmatpush1.msra.mxu0 0.0
    %276 = vmatprep.subr.mxu0 0.0
    %277 = vmatpush1.msra.mxu0 0.0
    %278 = vmatprep.subr.mxu0 0.0
    %279 = vmatpush1.msra.mxu0 0.0
    %280 = vmatprep.subr.mxu0 0.0
    %281 = vmatpush1.msra.mxu0 0.0
    %282 = vmatprep.subr.mxu0 0.0
    %283 = vmatpush1.msra.mxu0 0.0
    %284 = vmatprep.subr.mxu0 0.0
    %285 = vmatpush1.msra.mxu0 0.0
    %286 = vmatprep.subr.mxu0 0.0
    %287 = vmatpush1.msra.mxu0 0.0
    %288 = vmatprep.subr.mxu0 0.0
    %289 = vmatpush1.msra.mxu0 0.0
    %290 = vmatprep.subr.mxu0 0.0
    %291 = vmatpush1.msra.mxu0 0.0
    %292 = vmatprep.mubr.f32.mxu0 0.0
    %293 = vmatmul.mubr.f32.gmra.mrb[0].mxu0 %v223
    %v294 = vpop.f32.mrb[0].mxu0
    %v295 = vadd.f32 %v227, %v294
    %v296 = vpop.f32.mrb[0].mxu0
    %297 = vdwg.mxu0
    %298 = vst [vmem:[%s3] sm:$0xff] %v295
    %v299 = vlaneseq
    %v300 = vand.u32 %v299, 127
    %vm301 = vcmp.lt.s32.totalorder %v300, 6
    %v302 = vsel %vm301, %v295, -1e+30
    %303 = vmax.xlane.f32.xlu0 %v302
    %v304 = vpop.xlane.xlu0 %303
    %v305 = vsub.f32 %v302, %v304
    %v306 = vmul.f32 %v305, 1.442695
    %v307 = vpow.pop %v306
    %308 = vadd.xlane.f32.xlu0 %v307
    %v309 = vpop.xlane.xlu0 %308
    %v310 = vlog2.pop %v309
    %v311 = vmul.f32 %v310, 0.6931472
    %v312 = vsub.f32 %v305, %v311
    %313 = vst [vmem:[%s4] sm:$0xff] %v312
    // Predicated region
    $region18: #{mlp_discrete_forward.1} parent=1 // pred_check
      _
    $region19: #{mlp_discrete_forward.1} parent=1 // pred_check_branch
      %315 = sbr.rel (0) target = $region21
    $region20: #{mlp_discrete_forward.1} parent=1 // pred_region
      _
    $region21: #{mlp_discrete_forward.1} parent=1 // pred_fallthru
      _
    // Predicated region
    $region22: #{mlp_discrete_forward.1} parent=1 // pred_check
      _
    $region23: #{mlp_discrete_forward.1} parent=1 // pred_check_branch
      %317 = sbr.rel (0) target = $region25
    $region24: #{mlp_discrete_forward.1} parent=1 // pred_region
      _
    $region25: #{mlp_discrete_forward.1} parent=1 // pred_fallthru
      _
    // Predicated region
    $region26: #{mlp_discrete_forward.1} parent=1 // pred_check
      _
    $region27: #{mlp_discrete_forward.1} parent=1 // pred_check_branch
      %319 = sbr.rel (0) target = $region29
    $region28: #{mlp_discrete_forward.1} parent=1 // pred_region
      _
    $region29: #{mlp_discrete_forward.1} parent=1 // pred_fallthru
      _
    // Predicated region
    $region30: #{mlp_discrete_forward.1} parent=1 // pred_check
      _
    $region31: #{mlp_discrete_forward.1} parent=1 // pred_check_branch
      %321 = sbr.rel (0) target = $region33
    $region32: #{mlp_discrete_forward.1} parent=1 // pred_region
      _
    $region33: #{mlp_discrete_forward.1} parent=1 // pred_fallthru
      _
    %322 = vsyncpa [#allocation3], 1

</llo_original>
